<compile_context>
chip_gen: v6e
topology: v6e:2x2x1
jax: 0.10.0
libtpu: 0.0.40
codegen_flags: <defaults>
</compile_context>

<pallas_src>
import math
import functools

import jax
import jax.numpy as jnp
from jax.experimental import pallas as pl
from jax.experimental.pallas import tpu as pltpu


def _sinusoidal_kernel(x_ref, const_ref, out_ref, *, k):
    """x_ref: (tile_rows, k) f32, const_ref: (k+1, W) f32, out_ref: (tile_rows, W) f32.

    const_ref rows 0..k-1 are group-masked frequency rows (freq for lanes of
    group i, zero elsewhere); row k is the phase row (0 = sin, pi/2 = cos).
    """
    # Unrolled "select matmul" on the VPU: arg[r, j] = x[r, j // dim] * freq[j % dim].
    arg = x_ref[:, 0:1] * const_ref[0:1, :]
    for i in range(1, k):
        arg = arg + x_ref[:, i:i + 1] * const_ref[i:i + 1, :]
    # Single full-lane-width store; sin is the only transcendental per element.
    out_ref[...] = jnp.sin(arg + const_ref[k:k + 1, :])


def sinusoidal_pos_emb(x: jax.Array, dim: int) -> jax.Array:
    """Pallas equivalent of SinusoidalPosEmb(dim)(x).

    x: (N,) float array of positions / timesteps.
    returns: (N, dim) float32 embedding
             [:, :dim//2] = sin(x * freq), [:, dim//2:] = cos(x * freq).
    """
    assert dim % 2 == 0, "SinusoidalPosEmb requires an even dim"
    half_dim = dim // 2
    assert half_dim > 1, "dim must be >= 4 (torch module divides by half_dim-1)"

    n = x.shape[0]

    # Lane packing factor: fold k rows per output row so the last dim is 128.
    k = (128 // dim) if (dim < 128 and 128 % dim == 0) else 1
    W = k * dim

    n_pad = ((n + k - 1) // k) * k
    x_f32 = x.astype(jnp.float32)
    if n_pad != n:
        x_f32 = jnp.pad(x_f32, (0, n_pad - n))
    rows = n_pad // k
    x_packed = x_f32.reshape(rows, k)

    # --- Hoisted constant tables (computed once, outside the kernel). ---
    scale = math.log(10000.0) / (half_dim - 1)
    freqs = jnp.exp(-scale * jnp.arange(half_dim, dtype=jnp.float32))
    freqs_full = jnp.concatenate([freqs, freqs])                        # (dim,)
    phase_full = jnp.concatenate(
        [jnp.zeros((half_dim,), jnp.float32),
         jnp.full((half_dim,), jnp.pi / 2, dtype=jnp.float32)])         # (dim,)
    # freq_sel[i, g*dim + d] = freqs_full[d] if g == i else 0
    freq_sel = (jnp.eye(k, dtype=jnp.float32)[:, :, None]
                * freqs_full[None, None, :]).reshape(k, W)              # (k, W)
    phase_row = jnp.tile(phase_full, k).reshape(1, W)                   # (1, W)
    const = jnp.concatenate([freq_sel, phase_row], axis=0)              # (k+1, W)

    # --- dim-aware tile sizing (accounts for the 128-lane padding of x). ---
    # Per-buffer bytes per packed row: f32 out row (4*W) + lane-padded x row
    # (128 lanes * 4B regardless of k).  Target ~4 MiB per buffer set.
    bytes_per_row = 4 * W + 4 * 128
    target = max(8, ((4 * 1024 * 1024) // bytes_per_row) // 8 * 8)
    # v7x megacore: keep >= ~8 grid steps when there is enough work.
    mc_cap = max(8, ((pl.cdiv(rows, 8) + 7) // 8) * 8)
    tile_rows = min(target, mc_cap, ((rows + 7) // 8) * 8)
    if tile_rows >= rows:
        tile_rows = rows          # single full block (always a legal block shape)
    grid = (pl.cdiv(rows, tile_rows),)

    cost = pl.CostEstimate(
        flops=2 * k * rows * W,            # k broadcast-muls + adds per output elem
        transcendentals=rows * W,          # one sin per output element
        bytes_accessed=4 * (rows * k + (k + 1) * W + rows * W),
    )

    out_packed = pl.pallas_call(
        functools.partial(_sinusoidal_kernel, k=k),
        out_shape=jax.ShapeDtypeStruct((rows, W), jnp.float32),
        grid_spec=pltpu.PrefetchScalarGridSpec(
            num_scalar_prefetch=0,
            grid=grid,
            in_specs=[
                pl.BlockSpec((tile_rows, k), lambda i: (i, 0)),
                # Single tiny fused freq+phase constant; resident across steps.
                pl.BlockSpec((k + 1, W), lambda i: (0, 0)),
            ],
            out_specs=pl.BlockSpec((tile_rows, W), lambda i: (i, 0)),
        ),
        compiler_params=pltpu.CompilerParams(
            dimension_semantics=("parallel",),
            vmem_limit_bytes=32 * 1024 * 1024,
        ),
        cost_estimate=cost,
    )(x_packed, const)

    # Row-major-preserving reshape back to (N, dim); drop pad rows if any.
    out = out_packed.reshape(n_pad, dim)
    return out if n_pad == n else out[:n]


def _reference(x, dim):
    half_dim = dim // 2
    emb = math.log(10000.0) / (half_dim - 1)
    emb = jnp.exp(jnp.arange(half_dim, dtype=jnp.float32) * -emb)
    emb = x.astype(jnp.float32)[:, None] * emb[None, :]
    return jnp.concatenate([jnp.sin(emb), jnp.cos(emb)], axis=-1)


if __name__ == "__main__":
    key = jax.random.PRNGKey(0)

    # Primary small test consistent with the module's use (diffusion timesteps).
    # dim=32 -> k=4 lane packing, single grid step.
    n, dim = 8, 32
    x = jax.random.uniform(key, (n,), dtype=jnp.float32, minval=0.0, maxval=1000.0)
    out = jax.block_until_ready(sinusoidal_pos_emb(x, dim))
    ref = _reference(x, dim)
    assert out.shape == (n, dim), out.shape
    # atol covers the f32 rounding of the sin(t + pi/2) rewrite at args ~1e3.
    assert jnp.allclose(out, ref, atol=2e-4, rtol=1e-5), float(jnp.max(jnp.abs(out - ref)))

    # Multi-step grid with a partial last block: dim=64 -> k=2 packing.
    key2 = jax.random.PRNGKey(0)
    n2, dim2 = 1000, 64
    x2 = jax.random.uniform(key2, (n2,), dtype=jnp.float32, minval=0.0, maxval=1000.0)
    out2 = jax.block_until_ready(sinusoidal_pos_emb(x2, dim2))
    ref2 = _reference(x2, dim2)
    assert out2.shape == (n2, dim2), out2.shape
    assert jnp.allclose(out2, ref2, atol=2e-4, rtol=1e-5), float(jnp.max(jnp.abs(out2 - ref2)))

    # k == 1 path (already lane-dense), multi-step grid.
    key3 = jax.random.PRNGKey(0)
    n3, dim3 = 16, 128
    x3 = jax.random.uniform(key3, (n3,), dtype=jnp.float32, minval=0.0, maxval=1000.0)
    out3 = jax.block_until_ready(sinusoidal_pos_emb(x3, dim3))
    ref3 = _reference(x3, dim3)
    assert out3.shape == (n3, dim3), out3.shape
    assert jnp.allclose(out3, ref3, atol=2e-4, rtol=1e-5), float(jnp.max(jnp.abs(out3 - ref3)))

    print("KERNEL_OK")
</pallas_src>

<mosaic_0001>
module attributes {stable_mosaic.version = 11 : i64} {
  func.func @_sinusoidal_kernel(%arg0: i32, %arg1: memref<2x4xf32, #tpu.memory_space<vmem>>, %arg2: memref<5x128xf32, #tpu.memory_space<vmem>>, %arg3: memref<2x128xf32, #tpu.memory_space<vmem>>) attributes {dimension_semantics = [#tpu.dimension_semantics<parallel>], iteration_bounds = array<i64: 1>, scalar_prefetch = 0 : i64, scratch_operands = 0 : i64, tpu.core_type = #tpu.core_type<tc>, window_params = [{transform_indices = @transform_0, window_bounds = array<i64: 2, 4>}, {pipeline_mode = #tpu.pipeline_mode<synchronous>, transform_indices = @transform_1, window_bounds = array<i64: 5, 128>}, {transform_indices = @transform_2, window_bounds = array<i64: 2, 128>}]} {
    %c0 = arith.constant 0 : index
    %c0_0 = arith.constant 0 : index
    %0 = vector.load %arg1[%c0, %c0_0] : memref<2x4xf32, #tpu.memory_space<vmem>>, vector<2x1xf32>
    %c0_1 = arith.constant 0 : index
    %c0_2 = arith.constant 0 : index
    %1 = vector.load %arg2[%c0_1, %c0_2] : memref<5x128xf32, #tpu.memory_space<vmem>>, vector<1x128xf32>
    %2 = vector.broadcast %0 : vector<2x1xf32> to vector<2x128xf32>
    %3 = vector.broadcast %1 : vector<1x128xf32> to vector<2x128xf32>
    %4 = arith.mulf %2, %3 : vector<2x128xf32>
    %c0_3 = arith.constant 0 : index
    %c1 = arith.constant 1 : index
    %5 = vector.load %arg1[%c0_3, %c1] : memref<2x4xf32, #tpu.memory_space<vmem>>, vector<2x1xf32>
    %c1_4 = arith.constant 1 : index
    %c0_5 = arith.constant 0 : index
    %6 = vector.load %arg2[%c1_4, %c0_5] : memref<5x128xf32, #tpu.memory_space<vmem>>, vector<1x128xf32>
    %7 = vector.broadcast %5 : vector<2x1xf32> to vector<2x128xf32>
    %8 = vector.broadcast %6 : vector<1x128xf32> to vector<2x128xf32>
    %9 = arith.mulf %7, %8 : vector<2x128xf32>
    %10 = arith.addf %4, %9 : vector<2x128xf32>
    %c0_6 = arith.constant 0 : index
    %c2 = arith.constant 2 : index
    %11 = vector.load %arg1[%c0_6, %c2] : memref<2x4xf32, #tpu.memory_space<vmem>>, vector<2x1xf32>
    %c2_7 = arith.constant 2 : index
    %c0_8 = arith.constant 0 : index
    %12 = vector.load %arg2[%c2_7, %c0_8] : memref<5x128xf32, #tpu.memory_space<vmem>>, vector<1x128xf32>
    %13 = vector.broadcast %11 : vector<2x1xf32> to vector<2x128xf32>
    %14 = vector.broadcast %12 : vector<1x128xf32> to vector<2x128xf32>
    %15 = arith.mulf %13, %14 : vector<2x128xf32>
    %16 = arith.addf %10, %15 : vector<2x128xf32>
    %c0_9 = arith.constant 0 : index
    %c3 = arith.constant 3 : index
    %17 = vector.load %arg1[%c0_9, %c3] : memref<2x4xf32, #tpu.memory_space<vmem>>, vector<2x1xf32>
    %c3_10 = arith.constant 3 : index
    %c0_11 = arith.constant 0 : index
    %18 = vector.load %arg2[%c3_10, %c0_11] : memref<5x128xf32, #tpu.memory_space<vmem>>, vector<1x128xf32>
    %19 = vector.broadcast %17 : vector<2x1xf32> to vector<2x128xf32>
    %20 = vector.broadcast %18 : vector<1x128xf32> to vector<2x128xf32>
    %21 = arith.mulf %19, %20 : vector<2x128xf32>
    %22 = arith.addf %16, %21 : vector<2x128xf32>
    %c4 = arith.constant 4 : index
    %c0_12 = arith.constant 0 : index
    %23 = vector.load %arg2[%c4, %c0_12] : memref<5x128xf32, #tpu.memory_space<vmem>>, vector<1x128xf32>
    %24 = vector.broadcast %23 : vector<1x128xf32> to vector<2x128xf32>
    %25 = arith.addf %22, %24 : vector<2x128xf32>
    %26 = math.sin %25 : vector<2x128xf32>
    %c0_13 = arith.constant 0 : index
    %c0_14 = arith.constant 0 : index
    %27 = vector.load %arg3[%c0_13, %c0_14] : memref<2x128xf32, #tpu.memory_space<vmem>>, vector<2x128xf32>
    tpu.vector_store %arg3[%c0_13, %c0_14], %26 {strides = array<i32>} : memref<2x128xf32, #tpu.memory_space<vmem>>, vector<2x128xf32>,
    return
  }
  func.func @transform_0(%arg0: i32) -> (i32, i32) {
    %c0_i32 = arith.constant 0 : i32
    %c0_i32_0 = arith.constant 0 : i32
    return %arg0, %c0_i32 : i32, i32
  }
  func.func @transform_1(%arg0: i32) -> (i32, i32) {
    %c0_i32 = arith.constant 0 : i32
    %c0_i32_0 = arith.constant 0 : i32
    %c0_i32_1 = arith.constant 0 : i32
    return %c0_i32, %c0_i32_0 : i32, i32
  }
  func.func @transform_2(%arg0: i32) -> (i32, i32) {
    %c0_i32 = arith.constant 0 : i32
    %c0_i32_0 = arith.constant 0 : i32
    return %arg0, %c0_i32 : i32, i32
  }
}

</mosaic_0001>

<llo_original>
// kernel: tpu_custom_call.1
$region0: #{tpu_custom_call.1}
  #allocation0 [shape = 'u32[]', space=smem, size = 0x4, offset = 0x4, fixed_abs, tag = 'smem constant byte address 0x4 - core index']
  #allocation1 [shape = 'u32[144,128]{1,0:T(1,128)}', space=vmem, size = 0x12000, scoped, tag = 'internal scratch']
  %s0 = inlined_call_operand.hbm [shape: f32[2,4], index: 0, kind: input, shape index: {}]
  %s1 = inlined_call_operand.hbm [shape: f32[5,128], index: 1, kind: input, shape index: {}]
  %s2 = inlined_call_operand.hbm [shape: f32[2,128], index: 2, kind: output, shape index: {}]
  %s3 = sld [smem:[#allocation0]]
  $region26: #{tpu_custom_call.1} parent=0
    _
  %s5 = ssub.s32 1, %s3
  %s6 = scalar_select 0, %s5, %s3
  $region1: #{tpu_custom_call.1} parent=0
    #allocation2 [shape = 'u8[1024]{0}', space=vmem, size = 0x400, scoped, tag = 'input window, operand 0, single buffered']
    #allocation3 [shape = 's32[1]{0}', space=sflag, size = 0x4, scoped, tag = 'scoped memory for tpu_custom_call.1']
    #allocation4 [shape = 's32[1]{0}', space=sflag, size = 0x4, scoped, tag = 'scoped memory for tpu_custom_call.1']
    #allocation5 [shape = 'u8[4096]{0}', space=vmem, size = 0x1000, scoped, tag = 'input window, operand 1, single buffered']
    #allocation6 [shape = 's32[1]{0}', space=sflag, size = 0x4, scoped, tag = 'scoped memory for tpu_custom_call.1']
    #allocation7 [shape = 'u8[1024]{0}', space=vmem, size = 0x400, scoped, tag = 'output window, operand 0, single buffered']
    %7 = vsyncpa [#allocation3], 0
    %8 = vsyncpa [#allocation6], 0
    %9 = vsyncpa [#allocation4], 0
    // Predicated region
    $region2: #{tpu_custom_call.1} parent=1 // pred_check
      _
    $region3: #{tpu_custom_call.1} parent=1 // pred_check_branch
      %11 = sbr.rel (0) target = $region5
    $region4: #{tpu_custom_call.1} parent=1 // pred_region
      %s13 = ssub.s32 32, 32
      %14 = vsyncadd [#allocation3], %s13
      %s16 = sshll.u32 [#allocation2], 4
      %s17 = int_to_ptr.vmem [resolvable:$true] %s16
      %19 = dma.hbm_to_vmem [thread:$0]  %s0, 32, %s17, [#allocation3]
    $region5: #{tpu_custom_call.1} parent=1 // pred_fallthru
      _
    // Predicated region
    $region6: #{tpu_custom_call.1} parent=1 // pred_check
      _
    $region7: #{tpu_custom_call.1} parent=1 // pred_check_branch
      %21 = sbr.rel (0) target = $region9
    $region8: #{tpu_custom_call.1} parent=1 // pred_region
      %s23 = ssub.s32 128, 128
      %24 = vsyncadd [#allocation6], %s23
      %s26 = sshll.u32 [#allocation5], 4
      %s27 = int_to_ptr.vmem [resolvable:$true] %s26
      %29 = dma.hbm_to_vmem [thread:$0]  %s1, 128, %s27, [#allocation6]
    $region9: #{tpu_custom_call.1} parent=1 // pred_fallthru
      _
    // Predicated region
    $region10: #{tpu_custom_call.1} parent=1 // pred_check
      _
    $region11: #{tpu_custom_call.1} parent=1 // pred_check_branch
      %31 = sbr.rel (0) target = $region13
    $region12: #{tpu_custom_call.1} parent=1 // pred_region
      %32 = dma.done [#allocation3], 32
    $region13: #{tpu_custom_call.1} parent=1 // pred_fallthru
      _
    // Predicated region
    $region14: #{tpu_custom_call.1} parent=1 // pred_check
      _
    $region15: #{tpu_custom_call.1} parent=1 // pred_check_branch
      %34 = sbr.rel (0) target = $region17
    $region16: #{tpu_custom_call.1} parent=1 // pred_region
      %35 = dma.done [#allocation6], 128
    $region17: #{tpu_custom_call.1} parent=1 // pred_fallthru
      _
    %v36 = vld [vmem:[#allocation2] sm:$0x3]
    %v37 = vld [vmem:[#allocation5] sm:$0x1]
    %39 = vset.pattern.permute.xlu0 0
    %40 = vperm.xlu0 %39, %v36
    %v41 = vpop.permute.xlu0 %40
    %v43 = vlaneseq
    %v44 = vshrl.u32 %v43, 7
    %v45 = vsub.s32 0, %v44
    %v46 = vrot.slane %v37, %v45
    %v47 = vmul.f32 %v41, %v46
    %v48 = vld [vmem:[#allocation5 + $0x1] sm:$0x1]
    %49 = vset.pattern.permute.xlu0 1
    %50 = vperm.xlu0 %49, %v36
    %v51 = vpop.permute.xlu0 %50
    %v53 = vlaneseq
    %v54 = vshrl.u32 %v53, 7
    %v55 = vsub.s32 0, %v54
    %v56 = vrot.slane %v48, %v55
    %v57 = vmul.f32 %v51, %v56
    %v58 = vadd.f32 %v47, %v57
    %v59 = vld [vmem:[#allocation5 + $0x2] sm:$0x1]
    %60 = vset.pattern.permute.xlu0 2
    %61 = vperm.xlu0 %60, %v36
    %v62 = vpop.permute.xlu0 %61
    %v64 = vlaneseq
    %v65 = vshrl.u32 %v64, 7
    %v66 = vsub.s32 0, %v65
    %v67 = vrot.slane %v59, %v66
    %v68 = vmul.f32 %v62, %v67
    %v69 = vadd.f32 %v58, %v68
    %v70 = vld [vmem:[#allocation5 + $0x3] sm:$0x1]
    %71 = vset.pattern.permute.xlu0 3
    %72 = vperm.xlu0 %71, %v36
    %v73 = vpop.permute.xlu0 %72
    %v75 = vlaneseq
    %v76 = vshrl.u32 %v75, 7
    %v77 = vsub.s32 0, %v76
    %v78 = vrot.slane %v70, %v77
    %v79 = vmul.f32 %v73, %v78
    %v80 = vadd.f32 %v69, %v79
    %v81 = vld [vmem:[#allocation5 + $0x4] sm:$0x1]
    %v82 = vlaneseq
    %v83 = vshrl.u32 %v82, 7
    %v84 = vsub.s32 0, %v83
    %v85 = vrot.slane %v81, %v84
    %v86 = vadd.f32 %v80, %v85
    %v87 = vand.u32 2147483647, %v86
    %vm88 = vcmp.le.f32.partialorder %v87, 0.7853982
    %vm89 = vcmp.lt.s32.totalorder %v86, 0
    %v90 = vand.u32 %v86, 2139095040
    %v91 = vshrl.u32 %v90, 23
    %v92 = vsub.s32 %v91, 127
    %v93 = vand.u32 2147483647, %v86
    %v94 = vand.u32 %v93, 8388607
    %v95 = vor.u32 %v94, 8388608
    %v96 = vsub.s32 0, %v95
    %v97 = vadd.s32 %v92, 1
    %vm98 = vcmp.gt.s32.totalorder %v97, 0
    %v99 = vsel %vm98, %v97, 0
    %v100 = vshrl.u32 %v99, 5
    %v101 = vand.u32 %v99, 31
    %v102 = vsub.s32 32, %v101
    %v103 = vshrl.u32 683565275, %v102
    %v104 = vshll.u32 683565275, %v101
    %v105 = vshrl.u32 2475754826, %v102
    %v106 = vor.u32 %v104, %v105
    %v107 = vshll.u32 2475754826, %v101
    %v108 = vshrl.u32 2131351028, %v102
    %v109 = vor.u32 %v107, %v108
    %v110 = vshll.u32 2131351028, %v101
    %v111 = vshrl.u32 2102212464, %v102
    %v112 = vor.u32 %v110, %v111
    %v113 = vshll.u32 2102212464, %v101
    %v114 = vshrl.u32 920167782, %v102
    %v115 = vor.u32 %v113, %v114
    %v116 = vshll.u32 920167782, %v101
    %v117 = vshrl.u32 1326507024, %v102
    %v118 = vor.u32 %v116, %v117
    %vm119 = vcmp.lt.s32.totalorder %v100, 1
    %vm120 = vcmp.lt.s32.totalorder %v100, 2
    %vm121 = vcmp.lt.s32.totalorder %v100, 3
    %vm122 = vcmp.lt.s32.totalorder %v100, 4
    %v123 = vsel %vm119, %v103, %v106
    %v124 = vsel %vm122, %v112, 2102212464
    %v125 = vsel %vm121, %v109, %v124
    %v126 = vsel %vm120, %v123, %v125
    %v127 = vsel %vm119, %v106, %v109
    %v128 = vsel %vm122, %v115, 920167782
    %v129 = vsel %vm121, %v112, %v128
    %v130 = vsel %vm120, %v127, %v129
    %v131 = vsel %vm119, %v109, %v112
    %v132 = vsel %vm122, %v118, 1326507024
    %v133 = vsel %vm121, %v115, %v132
    %v134 = vsel %vm120, %v131, %v133
    %v135 = vshll.u32 %v95, 8
    %v136 = vmul.u32.u64.compose %v135, %v134
    %v137 = vextract.low.u32 %v136
    %v138 = vextract.high.u32 %v136
    %v139 = vmul.u32.u64.compose %v135, %v130
    %v140 = vextract.low.u32 %v139
    %v141 = vextract.high.u32 %v139
    %v142 = vmul.u32 %v135, %v126
    %v143 = vadd.s32 %v138, %v140
    %vm144 = vc.u32 %v138, %v140
    %v145 = vadd.s32 %v141, 1
    %v146 = vsel %vm144, %v145, %v141
    %v147 = vadd.s32 %v142, %v146
    %v148 = vadd.s32 %v147, 536870912
    %v149 = vshrl.u32 %v148, 30
    %v150 = vshll.u32 %v149, 30
    %v151 = vsub.s32 %v147, %v150
    %vm152 = vcmp.lt.s32.totalorder %v151, 0
    %v153 = vsub.s32 0, %v151
    %v154 = vsel %vm152, %v153, %v151
    %v155 = vclz %v154
    %v156 = vsub.s32 %v155, 2
    %vm157 = vcmp.gt.s32.totalorder 0, %v156
    %v158 = vsel %vm157, 0, %v156
    %v159 = vsub.s32 32, %v158
    %v160 = vshll.u32 %v151, %v158
    %v161 = vshrl.u32 %v143, %v159
    %v162 = vor.u32 %v160, %v161
    %v163 = vsub.s32 4294967266, %v158
    %v164 = vadd.s32 %v163, 127
    %v165 = vshll.u32 %v164, 23
    %v166 = vor.u32 4788187, %v165
    %v167 = vand.u32 2147483647, %v166
    %v169 = vcvt.s32.f32 %v162
    %v170 = vmul.f32 %v169, %v167
    %v171 = vxor.u32 %v170, 2147483648
    %v172 = vsel %vm89, %v171, %v170
    %v173 = vsub.s32 4, %v149
    %v174 = vsel %vm89, %v173, %v149
    %v175 = vsel %vm88, %v86, %v172
    %v176 = vsel %vm88, 0, %v174
    %v177 = vcosq.f32.pop %v175
    %v178 = vsinq.f32.pop %v175
    %vm179 = vweird.f32 %v86
    %v180 = vadd.s32 %v176, 3
    %v181 = vand.u32 %v180, 3
    %vm182 = vcmp.lt.s32.totalorder %v181, 2
    %vm183 = vcmp.eq.s32.totalorder %v181, 0
    %v184 = vxor.u32 %v178, 2147483648
    %v185 = vsel %vm183, %v177, %v184
    %vm186 = vcmp.eq.s32.totalorder %v181, 2
    %v187 = vxor.u32 %v177, 2147483648
    %v188 = vsel %vm186, %v187, %v178
    %v189 = vsel %vm182, %v185, %v188
    %v190 = vsel %vm179, nan, %v189
    %191 = vst [vmem:[#allocation7] sm:$0x3] %v190
    // Predicated region
    $region18: #{tpu_custom_call.1} parent=1 // pred_check
      _
    $region19: #{tpu_custom_call.1} parent=1 // pred_check_branch
      %193 = sbr.rel (0) target = $region21
    $region20: #{tpu_custom_call.1} parent=1 // pred_region
      %s195 = ssub.s32 32, 32
      %196 = vsyncadd [#allocation4], %s195
      %s198 = sshll.u32 [#allocation7], 4
      %s199 = int_to_ptr.vmem [resolvable:$true] %s198
      %201 = dma.vmem_to_hbm [thread:$0]  %s199, 32, %s2, [#allocation4]
    $region21: #{tpu_custom_call.1} parent=1 // pred_fallthru
      _
    // Predicated region
    $region22: #{tpu_custom_call.1} parent=1 // pred_check
      _
    $region23: #{tpu_custom_call.1} parent=1 // pred_check_branch
      %203 = sbr.rel (0) target = $region25
    $region24: #{tpu_custom_call.1} parent=1 // pred_region
      %204 = dma.done [#allocation4], 32
    $region25: #{tpu_custom_call.1} parent=1 // pred_fallthru
      _
    %205 = vsyncpa [#allocation3], 1
    %206 = vsyncpa [#allocation6], 1
    %207 = vsyncpa [#allocation4], 1

</llo_original>
